<compile_context>
chip_gen: v7x
topology: tpu7x:2x2x1
jax: 0.10.0
libtpu: 0.0.40
codegen_flags: <defaults>
</compile_context>

<pallas_src>
import jax
import jax.numpy as jnp
from jax.experimental import pallas as pl
from jax.experimental.pallas import tpu as pltpu

NEG_SLOPE = 0.01   # nn.LeakyReLU default
LN_EPS = 1e-5      # nn.LayerNorm default


def _layernorm(h, gamma, beta):
    # h: (C, T_TILE) f32 — normalize over the channel (sublane) axis per step.
    mu = jnp.mean(h, axis=0, keepdims=True)
    d = h - mu                                    # reused for var and normalise
    var = jnp.mean(d * d, axis=0, keepdims=True)
    return d * jax.lax.rsqrt(var + LN_EPS) * gamma + beta


def _leaky_relu(h):
    return jnp.where(h >= 0, h, NEG_SLOPE * h)


def _make_kernel(dot_dtype):
    def kernel(x_ref,
               w1_ref, b1_ref, g1_ref, be1_ref,
               w2_ref, b2_ref, g2_ref, be2_ref,
               w3_ref, b3_ref,
               o_ref):
        # x_ref: (Bb, C_in, T_TILE)   o_ref: (Bb, out_size, T_TILE)
        # Params are tiny whole-array VMEM blocks; load once per grid step.
        w1 = w1_ref[...]; b1 = b1_ref[...]; g1 = g1_ref[...]; be1 = be1_ref[...]
        w2 = w2_ref[...]; b2 = b2_ref[...]; g2 = g2_ref[...]; be2 = be2_ref[...]
        w3 = w3_ref[...]; b3 = b3_ref[...]

        bb = x_ref.shape[0]
        for bi in range(bb):                     # small static unroll (bb <= 8)
            x = x_ref[bi].astype(dot_dtype)

            # Layer 1: Conv1d(ks=1) -> LayerNorm(channels) -> LeakyReLU
            h = jnp.dot(w1, x, preferred_element_type=jnp.float32) + b1
            h = _leaky_relu(_layernorm(h, g1, be1))

            # Layer 2: Conv1d(ks=1) -> LayerNorm(channels) -> LeakyReLU
            h = jnp.dot(w2, h.astype(dot_dtype),
                        preferred_element_type=jnp.float32) + b2
            h = _leaky_relu(_layernorm(h, g2, be2))

            # Layer 3: Conv1d(ks=1), no norm / activation
            h = jnp.dot(w3, h.astype(dot_dtype),
                        preferred_element_type=jnp.float32) + b3

            o_ref[bi] = h.astype(o_ref.dtype)
    return kernel


def _round_up(v, m):
    return ((v + m - 1) // m) * m


def time_distributed_mlp(x, params, *, t_tile=1024, max_batch_block=8,
                         dot_dtype=jnp.bfloat16):
    """x: (B, C_in, T) float32.  Returns (B, out_size, T)."""
    (w1, b1, g1, be1, w2, b2, g2, be2, w3, b3) = params
    B, C_in, T = x.shape
    out_size = w3.shape[0]

    # ---- time tiling: full T for short sequences (block dim == array dim is
    # always legal), otherwise a lane-dense multiple of 128.  Remainder time
    # blocks are safe: every time column is independent and Pallas masks the
    # out-of-bounds output lanes on writeback. -----------------------------
    if T <= t_tile:
        tt = T
    else:
        tt = max(128, (t_tile // 128) * 128)

    # ---- batch blocking: for short sequences pack several batches per grid
    # step so per-step work amortises the ~0.35us step overhead. -----------
    bb = 1
    if tt == T:
        bb = max(1, min(B, max_batch_block, t_tile // max(T, 1)))

    num_t = pl.cdiv(T, tt)
    num_b = pl.cdiv(B, bb)

    # ---- v7x: keep >= 2 parallel grid blocks when possible so both
    # TensorCores get work (no cost on single-TC v5e/v6e). ------------------
    if num_b * num_t < 2:
        if T >= 256:                      # split time into lane-dense halves
            tt = _round_up(pl.cdiv(T, 2), 128)
            num_t = pl.cdiv(T, tt)
        elif bb > 1:                      # else split the batch blocking
            bb = pl.cdiv(bb, 2)
            num_b = pl.cdiv(B, bb)

    grid = (num_b, num_t)

    # MXU operands in dot_dtype (bf16 by default, f32 accumulate).  Biases and
    # LN params stay f32 — all elementwise math is f32 (v5e-safe).
    wc = lambda w: w.astype(dot_dtype)

    x_spec = pl.BlockSpec((bb, C_in, tt), lambda b, t: (b, 0, t))
    o_spec = pl.BlockSpec((bb, out_size, tt), lambda b, t: (b, 0, t))
    # Params: whole-array blocks with constant index_map -> DMA'd once and
    # VMEM-resident across the whole grid.
    full = lambda a: pl.BlockSpec(a.shape, lambda b, t: (0, 0))

    out = pl.pallas_call(
        _make_kernel(dot_dtype),
        out_shape=jax.ShapeDtypeStruct((B, out_size, T), x.dtype),
        grid_spec=pltpu.PrefetchScalarGridSpec(
            num_scalar_prefetch=0,
            grid=grid,
            in_specs=[
                x_spec,
                full(w1), full(b1), full(g1), full(be1),
                full(w2), full(b2), full(g2), full(be2),
                full(w3), full(b3),
            ],
            out_specs=o_spec,
        ),
        compiler_params=pltpu.CompilerParams(
            dimension_semantics=("parallel", "parallel")),
    )(x, wc(w1), b1, g1, be1, wc(w2), b2, g2, be2, wc(w3), b3)
    return out


def init_params(key, in_size, hidden_size, out_size):
    """Deterministic synthetic params.

    Conv1d weight (out, in, 1) is stored as (out, in) so the kernel computes
    W @ x_block directly.  Biases / LN affine params are (C, 1) columns
    (broadcast over the time/lane axis inside the kernel).  LN affine params
    are given non-trivial values to exercise the general affine path.
    """
    ks = jax.random.split(key, 10)
    w1 = jax.random.normal(ks[0], (hidden_size, in_size), jnp.float32) * 0.2
    b1 = jax.random.normal(ks[1], (hidden_size, 1), jnp.float32) * 0.1
    w2 = jax.random.normal(ks[2], (hidden_size, hidden_size), jnp.float32) * 0.2
    b2 = jax.random.normal(ks[3], (hidden_size, 1), jnp.float32) * 0.1
    w3 = jax.random.normal(ks[4], (out_size, hidden_size), jnp.float32) * 0.2
    b3 = jax.random.normal(ks[5], (out_size, 1), jnp.float32) * 0.1
    g1 = 1.0 + 0.1 * jax.random.normal(ks[6], (hidden_size, 1), jnp.float32)
    be1 = 0.1 * jax.random.normal(ks[7], (hidden_size, 1), jnp.float32)
    g2 = 1.0 + 0.1 * jax.random.normal(ks[8], (hidden_size, 1), jnp.float32)
    be2 = 0.1 * jax.random.normal(ks[9], (hidden_size, 1), jnp.float32)
    return (w1, b1, g1, be1, w2, b2, g2, be2, w3, b3)


def reference_forward(x, params):
    """Plain-JAX reference of the PyTorch forward, for sanity checks."""
    (w1, b1, g1, be1, w2, b2, g2, be2, w3, b3) = params

    def conv(h, w, b):          # w: (out, in), b: (out, 1)
        return jnp.einsum('oc,bct->bot', w, h) + b[None, :, :]

    def ln(h, g, be):           # normalize over channel axis (1)
        mu = h.mean(1, keepdims=True)
        var = ((h - mu) ** 2).mean(1, keepdims=True)
        return (h - mu) / jnp.sqrt(var + LN_EPS) * g[None, :, :] + be[None, :, :]

    def lrelu(h):
        return jnp.where(h >= 0, h, NEG_SLOPE * h)

    h = lrelu(ln(conv(x, w1, b1), g1, be1))
    h = lrelu(ln(conv(h, w2, b2), g2, be2))
    return conv(h, w3, b3)


if __name__ == "__main__":
    key = jax.random.PRNGKey(0)
    kx, kp, kx2 = jax.random.split(key, 3)

    # Config 1: small module-consistent shapes.
    B, C_in, T = 2, 4, 16
    hidden, out_size = 32, 8
    x = jax.random.normal(kx, (B, C_in, T), jnp.float32)
    params = init_params(kp, C_in, hidden, out_size)
    ref = reference_forward(x, params)

    # (a) exact-semantics check: f32 MXU operands, tight tolerance.
    out = jax.block_until_ready(
        time_distributed_mlp(x, params, dot_dtype=jnp.float32))
    assert out.shape == (B, out_size, T), out.shape
    assert jnp.allclose(out, ref, atol=1e-4, rtol=1e-4), \
        float(jnp.max(jnp.abs(out - ref)))

    # (b) default perf config: bf16 MXU operands, f32 accumulate/LN/activation.
    out_bf = jax.block_until_ready(time_distributed_mlp(x, params))
    assert out_bf.shape == (B, out_size, T), out_bf.shape
    assert jnp.allclose(out_bf, ref, atol=1e-1, rtol=1e-1), \
        float(jnp.max(jnp.abs(out_bf - ref)))

    # Config 2: longer sequence + B=1 — exercises the >=2 time-tile split
    # (both v7x TCs active) and remainder (edge) time blocks.
    B2, T2 = 1, 384
    x2 = jax.random.normal(kx2, (B2, C_in, T2), jnp.float32)
    ref2 = reference_forward(x2, params)
    out2 = jax.block_until_ready(time_distributed_mlp(x2, params))
    assert out2.shape == (B2, out_size, T2), out2.shape
    assert jnp.allclose(out2, ref2, atol=1e-1, rtol=1e-1), \
        float(jnp.max(jnp.abs(out2 - ref2)))

    print("KERNEL_OK")
</pallas_src>

<mosaic_0001>
module attributes {stable_mosaic.version = 11 : i64} {
  func.func @kernel(%arg0: i32, %arg1: i32, %arg2: memref<1x4x16xf32, #tpu.memory_space<vmem>>, %arg3: memref<32x4xf32, #tpu.memory_space<vmem>>, %arg4: memref<32x1xf32, #tpu.memory_space<vmem>>, %arg5: memref<32x1xf32, #tpu.memory_space<vmem>>, %arg6: memref<32x1xf32, #tpu.memory_space<vmem>>, %arg7: memref<32x32xf32, #tpu.memory_space<vmem>>, %arg8: memref<32x1xf32, #tpu.memory_space<vmem>>, %arg9: memref<32x1xf32, #tpu.memory_space<vmem>>, %arg10: memref<32x1xf32, #tpu.memory_space<vmem>>, %arg11: memref<8x32xf32, #tpu.memory_space<vmem>>, %arg12: memref<8x1xf32, #tpu.memory_space<vmem>>, %arg13: memref<1x8x16xf32, #tpu.memory_space<vmem>>) attributes {dimension_semantics = [#tpu.dimension_semantics<parallel>, #tpu.dimension_semantics<parallel>], iteration_bounds = array<i64: 2, 1>, scalar_prefetch = 0 : i64, scratch_operands = 0 : i64, tpu.core_type = #tpu.core_type<tc>, window_params = [{transform_indices = @transform_0, window_bounds = array<i64: 1, 4, 16>}, {pipeline_mode = #tpu.pipeline_mode<synchronous>, transform_indices = @transform_1, window_bounds = array<i64: 32, 4>}, {pipeline_mode = #tpu.pipeline_mode<synchronous>, transform_indices = @transform_2, window_bounds = array<i64: 32, 1>}, {pipeline_mode = #tpu.pipeline_mode<synchronous>, transform_indices = @transform_3, window_bounds = array<i64: 32, 1>}, {pipeline_mode = #tpu.pipeline_mode<synchronous>, transform_indices = @transform_4, window_bounds = array<i64: 32, 1>}, {pipeline_mode = #tpu.pipeline_mode<synchronous>, transform_indices = @transform_5, window_bounds = array<i64: 32, 32>}, {pipeline_mode = #tpu.pipeline_mode<synchronous>, transform_indices = @transform_6, window_bounds = array<i64: 32, 1>}, {pipeline_mode = #tpu.pipeline_mode<synchronous>, transform_indices = @transform_7, window_bounds = array<i64: 32, 1>}, {pipeline_mode = #tpu.pipeline_mode<synchronous>, transform_indices = @transform_8, window_bounds = array<i64: 32, 1>}, {pipeline_mode = #tpu.pipeline_mode<synchronous>, transform_indices = @transform_9, window_bounds = array<i64: 8, 32>}, {pipeline_mode = #tpu.pipeline_mode<synchronous>, transform_indices = @transform_10, window_bounds = array<i64: 8, 1>}, {transform_indices = @transform_11, window_bounds = array<i64: 1, 8, 16>}]} {
    %c0 = arith.constant 0 : index
    %c0_0 = arith.constant 0 : index
    %0 = vector.load %arg3[%c0, %c0_0] : memref<32x4xf32, #tpu.memory_space<vmem>>, vector<32x4xf32>
    %c0_1 = arith.constant 0 : index
    %c0_2 = arith.constant 0 : index
    %1 = vector.load %arg4[%c0_1, %c0_2] : memref<32x1xf32, #tpu.memory_space<vmem>>, vector<32x1xf32>
    %c0_3 = arith.constant 0 : index
    %c0_4 = arith.constant 0 : index
    %2 = vector.load %arg5[%c0_3, %c0_4] : memref<32x1xf32, #tpu.memory_space<vmem>>, vector<32x1xf32>
    %c0_5 = arith.constant 0 : index
    %c0_6 = arith.constant 0 : index
    %3 = vector.load %arg6[%c0_5, %c0_6] : memref<32x1xf32, #tpu.memory_space<vmem>>, vector<32x1xf32>
    %c0_7 = arith.constant 0 : index
    %c0_8 = arith.constant 0 : index
    %4 = vector.load %arg7[%c0_7, %c0_8] : memref<32x32xf32, #tpu.memory_space<vmem>>, vector<32x32xf32>
    %c0_9 = arith.constant 0 : index
    %c0_10 = arith.constant 0 : index
    %5 = vector.load %arg8[%c0_9, %c0_10] : memref<32x1xf32, #tpu.memory_space<vmem>>, vector<32x1xf32>
    %c0_11 = arith.constant 0 : index
    %c0_12 = arith.constant 0 : index
    %6 = vector.load %arg9[%c0_11, %c0_12] : memref<32x1xf32, #tpu.memory_space<vmem>>, vector<32x1xf32>
    %c0_13 = arith.constant 0 : index
    %c0_14 = arith.constant 0 : index
    %7 = vector.load %arg10[%c0_13, %c0_14] : memref<32x1xf32, #tpu.memory_space<vmem>>, vector<32x1xf32>
    %c0_15 = arith.constant 0 : index
    %c0_16 = arith.constant 0 : index
    %8 = vector.load %arg11[%c0_15, %c0_16] : memref<8x32xf32, #tpu.memory_space<vmem>>, vector<8x32xf32>
    %c0_17 = arith.constant 0 : index
    %c0_18 = arith.constant 0 : index
    %9 = vector.load %arg12[%c0_17, %c0_18] : memref<8x1xf32, #tpu.memory_space<vmem>>, vector<8x1xf32>
    %c0_19 = arith.constant 0 : index
    %c0_20 = arith.constant 0 : index
    %c0_21 = arith.constant 0 : index
    %10 = vector.load %arg2[%c0_19, %c0_20, %c0_21] : memref<1x4x16xf32, #tpu.memory_space<vmem>>, vector<1x4x16xf32>
    %11 = vector.shape_cast %10 : vector<1x4x16xf32> to vector<4x16xf32>
    %cst = arith.constant dense<0.000000e+00> : vector<32x16xf32>
    %12 = tpu.matmul %0, %11, %cst {dimension_numbers = #tpu.dot_dimension_numbers<[1], [0], [0], [1], [0, 0, 1, 1], [], []>} : vector<32x4xf32>, vector<4x16xf32>, vector<32x16xf32> -> vector<32x16xf32>
    %13 = vector.broadcast %1 : vector<32x1xf32> to vector<32x16xf32>
    %14 = arith.addf %12, %13 : vector<32x16xf32>
    %cst_22 = arith.constant dense<0.000000e+00> : vector<16xf32>
    %15 = vector.multi_reduction <add>, %14, %cst_22 [0] : vector<32x16xf32> to vector<16xf32>
    %16 = vector.shape_cast %15 : vector<16xf32> to vector<1x16xf32>
    %cst_23 = arith.constant 3.200000e+01 : f32
    %17 = vector.broadcast %cst_23 : f32 to vector<1x16xf32>
    %18 = arith.divf %16, %17 : vector<1x16xf32>
    %19 = vector.broadcast %18 : vector<1x16xf32> to vector<32x16xf32>
    %20 = arith.subf %14, %19 : vector<32x16xf32>
    %21 = arith.mulf %20, %20 : vector<32x16xf32>
    %cst_24 = arith.constant dense<0.000000e+00> : vector<16xf32>
    %22 = vector.multi_reduction <add>, %21, %cst_24 [0] : vector<32x16xf32> to vector<16xf32>
    %23 = vector.shape_cast %22 : vector<16xf32> to vector<1x16xf32>
    %cst_25 = arith.constant 3.200000e+01 : f32
    %24 = vector.broadcast %cst_25 : f32 to vector<1x16xf32>
    %25 = arith.divf %23, %24 : vector<1x16xf32>
    %cst_26 = arith.constant 9.99999974E-6 : f32
    %26 = vector.broadcast %cst_26 : f32 to vector<1x16xf32>
    %27 = arith.addf %25, %26 : vector<1x16xf32>
    %28 = math.rsqrt %27 : vector<1x16xf32>
    %29 = vector.broadcast %28 : vector<1x16xf32> to vector<32x16xf32>
    %30 = arith.mulf %20, %29 : vector<32x16xf32>
    %31 = vector.broadcast %2 : vector<32x1xf32> to vector<32x16xf32>
    %32 = arith.mulf %30, %31 : vector<32x16xf32>
    %33 = vector.broadcast %3 : vector<32x1xf32> to vector<32x16xf32>
    %34 = arith.addf %32, %33 : vector<32x16xf32>
    %cst_27 = arith.constant 0.000000e+00 : f32
    %35 = vector.broadcast %cst_27 : f32 to vector<32x16xf32>
    %36 = arith.cmpf oge, %34, %35 : vector<32x16xf32>
    %cst_28 = arith.constant 0.00999999977 : f32
    %37 = vector.broadcast %cst_28 : f32 to vector<32x16xf32>
    %38 = arith.mulf %37, %34 : vector<32x16xf32>
    %39 = arith.select %36, %34, %38 : vector<32x16xi1>, vector<32x16xf32>
    %cst_29 = arith.constant dense<0.000000e+00> : vector<32x16xf32>
    %40 = tpu.matmul %4, %39, %cst_29 {dimension_numbers = #tpu.dot_dimension_numbers<[1], [0], [0], [1], [0, 0, 1, 1], [], []>} : vector<32x32xf32>, vector<32x16xf32>, vector<32x16xf32> -> vector<32x16xf32>
    %41 = vector.broadcast %5 : vector<32x1xf32> to vector<32x16xf32>
    %42 = arith.addf %40, %41 : vector<32x16xf32>
    %cst_30 = arith.constant dense<0.000000e+00> : vector<16xf32>
    %43 = vector.multi_reduction <add>, %42, %cst_30 [0] : vector<32x16xf32> to vector<16xf32>
    %44 = vector.shape_cast %43 : vector<16xf32> to vector<1x16xf32>
    %cst_31 = arith.constant 3.200000e+01 : f32
    %45 = vector.broadcast %cst_31 : f32 to vector<1x16xf32>
    %46 = arith.divf %44, %45 : vector<1x16xf32>
    %47 = vector.broadcast %46 : vector<1x16xf32> to vector<32x16xf32>
    %48 = arith.subf %42, %47 : vector<32x16xf32>
    %49 = arith.mulf %48, %48 : vector<32x16xf32>
    %cst_32 = arith.constant dense<0.000000e+00> : vector<16xf32>
    %50 = vector.multi_reduction <add>, %49, %cst_32 [0] : vector<32x16xf32> to vector<16xf32>
    %51 = vector.shape_cast %50 : vector<16xf32> to vector<1x16xf32>
    %cst_33 = arith.constant 3.200000e+01 : f32
    %52 = vector.broadcast %cst_33 : f32 to vector<1x16xf32>
    %53 = arith.divf %51, %52 : vector<1x16xf32>
    %cst_34 = arith.constant 9.99999974E-6 : f32
    %54 = vector.broadcast %cst_34 : f32 to vector<1x16xf32>
    %55 = arith.addf %53, %54 : vector<1x16xf32>
    %56 = math.rsqrt %55 : vector<1x16xf32>
    %57 = vector.broadcast %56 : vector<1x16xf32> to vector<32x16xf32>
    %58 = arith.mulf %48, %57 : vector<32x16xf32>
    %59 = vector.broadcast %6 : vector<32x1xf32> to vector<32x16xf32>
    %60 = arith.mulf %58, %59 : vector<32x16xf32>
    %61 = vector.broadcast %7 : vector<32x1xf32> to vector<32x16xf32>
    %62 = arith.addf %60, %61 : vector<32x16xf32>
    %cst_35 = arith.constant 0.000000e+00 : f32
    %63 = vector.broadcast %cst_35 : f32 to vector<32x16xf32>
    %64 = arith.cmpf oge, %62, %63 : vector<32x16xf32>
    %cst_36 = arith.constant 0.00999999977 : f32
    %65 = vector.broadcast %cst_36 : f32 to vector<32x16xf32>
    %66 = arith.mulf %65, %62 : vector<32x16xf32>
    %67 = arith.select %64, %62, %66 : vector<32x16xi1>, vector<32x16xf32>
    %cst_37 = arith.constant dense<0.000000e+00> : vector<8x16xf32>
    %68 = tpu.matmul %8, %67, %cst_37 {dimension_numbers = #tpu.dot_dimension_numbers<[1], [0], [0], [1], [0, 0, 1, 1], [], []>} : vector<8x32xf32>, vector<32x16xf32>, vector<8x16xf32> -> vector<8x16xf32>
    %69 = vector.broadcast %9 : vector<8x1xf32> to vector<8x16xf32>
    %70 = arith.addf %68, %69 : vector<8x16xf32>
    %c0_38 = arith.constant 0 : index
    %c0_39 = arith.constant 0 : index
    %c0_40 = arith.constant 0 : index
    %71 = vector.load %arg13[%c0_38, %c0_39, %c0_40] : memref<1x8x16xf32, #tpu.memory_space<vmem>>, vector<1x8x16xf32>
    %72 = vector.shape_cast %71 : vector<1x8x16xf32> to vector<8x16xf32>
    %73 = vector.shape_cast %70 : vector<8x16xf32> to vector<1x8x16xf32>
    tpu.vector_store %arg13[%c0_38, %c0_39, %c0_40], %73 {strides = array<i32>} : memref<1x8x16xf32, #tpu.memory_space<vmem>>, vector<1x8x16xf32>,
    return
  }
  func.func @transform_0(%arg0: i32, %arg1: i32) -> (i32, i32, i32) {
    %c0_i32 = arith.constant 0 : i32
    %c0_i32_0 = arith.constant 0 : i32
    return %arg0, %c0_i32, %arg1 : i32, i32, i32
  }
  func.func @transform_1(%arg0: i32, %arg1: i32) -> (i32, i32) {
    %c0_i32 = arith.constant 0 : i32
    %c0_i32_0 = arith.constant 0 : i32
    %c0_i32_1 = arith.constant 0 : i32
    return %c0_i32, %c0_i32_0 : i32, i32
  }
  func.func @transform_2(%arg0: i32, %arg1: i32) -> (i32, i32) {
    %c0_i32 = arith.constant 0 : i32
    %c0_i32_0 = arith.constant 0 : i32
    %c0_i32_1 = arith.constant 0 : i32
    return %c0_i32, %c0_i32_0 : i32, i32
  }
  func.func @transform_3(%arg0: i32, %arg1: i32) -> (i32, i32) {
    %c0_i32 = arith.constant 0 : i32
    %c0_i32_0 = arith.constant 0 : i32
    %c0_i32_1 = arith.constant 0 : i32
    return %c0_i32, %c0_i32_0 : i32, i32
  }
  func.func @transform_4(%arg0: i32, %arg1: i32) -> (i32, i32) {
    %c0_i32 = arith.constant 0 : i32
    %c0_i32_0 = arith.constant 0 : i32
    %c0_i32_1 = arith.constant 0 : i32
    return %c0_i32, %c0_i32_0 : i32, i32
  }
  func.func @transform_5(%arg0: i32, %arg1: i32) -> (i32, i32) {
    %c0_i32 = arith.constant 0 : i32
    %c0_i32_0 = arith.constant 0 : i32
    %c0_i32_1 = arith.constant 0 : i32
    return %c0_i32, %c0_i32_0 : i32, i32
  }
  func.func @transform_6(%arg0: i32, %arg1: i32) -> (i32, i32) {
    %c0_i32 = arith.constant 0 : i32
    %c0_i32_0 = arith.constant 0 : i32
    %c0_i32_1 = arith.constant 0 : i32
    return %c0_i32, %c0_i32_0 : i32, i32
  }
  func.func @transform_7(%arg0: i32, %arg1: i32) -> (i32, i32) {
    %c0_i32 = arith.constant 0 : i32
    %c0_i32_0 = arith.constant 0 : i32
    %c0_i32_1 = arith.constant 0 : i32
    return %c0_i32, %c0_i32_0 : i32, i32
  }
  func.func @transform_8(%arg0: i32, %arg1: i32) -> (i32, i32) {
    %c0_i32 = arith.constant 0 : i32
    %c0_i32_0 = arith.constant 0 : i32
    %c0_i32_1 = arith.constant 0 : i32
    return %c0_i32, %c0_i32_0 : i32, i32
  }
  func.func @transform_9(%arg0: i32, %arg1: i32) -> (i32, i32) {
    %c0_i32 = arith.constant 0 : i32
    %c0_i32_0 = arith.constant 0 : i32
    %c0_i32_1 = arith.constant 0 : i32
    return %c0_i32, %c0_i32_0 : i32, i32
  }
  func.func @transform_10(%arg0: i32, %arg1: i32) -> (i32, i32) {
    %c0_i32 = arith.constant 0 : i32
    %c0_i32_0 = arith.constant 0 : i32
    %c0_i32_1 = arith.constant 0 : i32
    return %c0_i32, %c0_i32_0 : i32, i32
  }
  func.func @transform_11(%arg0: i32, %arg1: i32) -> (i32, i32, i32) {
    %c0_i32 = arith.constant 0 : i32
    %c0_i32_0 = arith.constant 0 : i32
    return %arg0, %c0_i32, %arg1 : i32, i32, i32
  }
}

</mosaic_0001>

<llo_original>
// kernel: tpu_custom_call.1
$region0: #{tpu_custom_call.1}
  #allocation0 [shape = 'u32[]', space=smem, size = 0x4, offset = 0x4, fixed_abs, tag = 'smem constant byte address 0x4 - core index']
  #allocation1 [shape = 'u32[144,128]{1,0:T(1,128)}', space=vmem, size = 0x12000, scoped, tag = 'internal scratch']
  %s0 = inlined_call_operand.vmem [shape: f32[2,4,16], index: 0, kind: input, shape index: {}]
  %s1 = inlined_call_operand.vmem [shape: f32[32,4], index: 1, kind: input, shape index: {}]
  %s2 = inlined_call_operand.vmem [shape: f32[32,1], index: 2, kind: input, shape index: {}]
  %s3 = inlined_call_operand.vmem [shape: f32[32,1], index: 3, kind: input, shape index: {}]
  %s4 = inlined_call_operand.vmem [shape: f32[32,1], index: 4, kind: input, shape index: {}]
  %s5 = inlined_call_operand.vmem [shape: f32[32,32], index: 5, kind: input, shape index: {}]
  %s6 = inlined_call_operand.vmem [shape: f32[32,1], index: 6, kind: input, shape index: {}]
  %s7 = inlined_call_operand.vmem [shape: f32[32,1], index: 7, kind: input, shape index: {}]
  %s8 = inlined_call_operand.vmem [shape: f32[32,1], index: 8, kind: input, shape index: {}]
  %s9 = inlined_call_operand.vmem [shape: f32[8,32], index: 9, kind: input, shape index: {}]
  %s10 = inlined_call_operand.vmem [shape: f32[8,1], index: 10, kind: input, shape index: {}]
  %s11 = inlined_call_operand.hbm [shape: f32[2,8,16], index: 11, kind: output, shape index: {}]
  %s12 = sld [smem:[#allocation0]]
  $region77: #{tpu_custom_call.1} parent=0
    _
  %s14 = ssub.s32 1, %s12
  %s15 = scalar_select 0, %s14, %s12
  $region1: #{tpu_custom_call.1} parent=0
    #allocation2 [shape = 'u8[8192]{0}', space=vmem, size = 0x2000, scoped, tag = 'output window, operand 0']
    #allocation3 [shape = 's32[2]{0}', space=sflag, size = 0x8, scoped, tag = 'scoped memory for tpu_custom_call.1']
    %16 = vsyncpa [#allocation3], 0
    %s17 = scalar_lea.sflag [#allocation3], 1
    %18 = vsyncpa %s17, 0
    loop: start=0, step=1, limit=4
    $region2: #{tpu_custom_call.1} parent=1 // loop_pre_header
      _
    $region3: #{tpu_custom_call.1} parent=1 // loop_header
      %s20 = sphi 0, %s24
      %p21 = scmp.ge.s32.totalorder %s20, 4
      %s27 = sphi 0, %s39
      %s28 = sphi 0, %s35
      %s29 = sphi 0, %s27
      %s30 = sphi 0, %s28
      %s31 = sphi 0, %s29
      %s32 = sphi 0, %s30
      %s44 = sphi 0, %s46
      %s47 = sphi 0, %s44
      %s48 = sphi 0, %s47
      %s64 = sphi 0, %s48
      %s68 = sphi 0, %s68
      %s70 = sphi 0, %s68
      %s71 = sphi 0, %s70
      %s85 = sphi 0, %s71
      %s89 = sphi 0, %s89
      %s91 = sphi 0, %s89
      %s92 = sphi 0, %s91
      %s106 = sphi 0, %s92
      %s110 = sphi 0, %s110
      %s112 = sphi 0, %s110
      %s113 = sphi 0, %s112
      %s127 = sphi 0, %s113
      %s131 = sphi 0, %s131
      %s133 = sphi 0, %s131
      %s134 = sphi 0, %s133
      %s148 = sphi 0, %s134
      %s152 = sphi 0, %s152
      %s154 = sphi 0, %s152
      %s155 = sphi 0, %s154
      %s169 = sphi 0, %s155
      %s173 = sphi 0, %s173
      %s175 = sphi 0, %s173
      %s176 = sphi 0, %s175
      %s190 = sphi 0, %s176
      %s194 = sphi 0, %s194
      %s196 = sphi 0, %s194
      %s197 = sphi 0, %s196
      %s211 = sphi 0, %s197
      %s215 = sphi 0, %s215
      %s217 = sphi 0, %s215
      %s218 = sphi 0, %s217
      %s232 = sphi 0, %s218
      %s236 = sphi 0, %s236
      %s238 = sphi 0, %s236
      %s239 = sphi 0, %s238
      %s253 = sphi 0, %s239
      %s257 = sphi 0, %s257
      %s259 = sphi 0, %s257
      %s260 = sphi 0, %s259
      %s274 = sphi 0, %s260
      %s282 = sphi 0, %s284
      %s285 = sphi 0, %s282
      %s286 = sphi 0, %s285
      %s302 = sphi 0, %s286
    $region4: #{tpu_custom_call.1} parent=1 // loop_header_branch
      %23 = sbr.rel (%p21) target = $region8
    $region5: #{tpu_custom_call.1} parent=1 // loop_body
      %s25 = ssub.s32 %s20, 1
      %s26 = ssub.s32 %s20, 2
      %s33 = sadd.s32 1, %s28
      %p34 = scmp.ge.s32.totalorder %s33, 1
      %s35 = scalar_select %p34, 0, %s33
      %s36 = sadd.s32 1, %s27
      %s37 = scalar_select %p34, %s36, %s27
      %p38 = scmp.ge.s32.totalorder %s37, 2
      %s39 = scalar_select %p38, 0, %s37
      %s40 = ssub.s32 %s27, %s39
      %s41 = ssub.s32 %s28, %s35
      %s42 = sor.u32 %s40, %s41
      %p43 = scmp.eq.s32.totalorder %s42, 0
      %s45 = sadd.s32 %s44, 1
      %s46 = scalar_select %p43, %s44, %s45
      %p49 = pneg %p43
      %p50 = scmp.eq.s32.totalorder %s20, 1
      %p51 = por %p49, %p50
      %p52 = scmp.ne.s32.totalorder %s44, %s47
      %p53 = scmp.eq.s32.totalorder %s20, 0
      %p54 = por %p52, %p53
      %p55 = scmp.ne.s32.totalorder %s44, %s47
      %p56 = scmp.eq.s32.totalorder %s25, 1
      %p57 = por %p55, %p56
      %p58 = scmp.ne.s32.totalorder %s47, %s48
      %p59 = scmp.eq.s32.totalorder %s25, 0
      %p60 = por %p58, %p59
      %p61 = scmp.ne.s32.totalorder %s47, %s48
      %p62 = scmp.eq.s32.totalorder %s26, 1
      %p63 = por %p61, %p62
      %p65 = scmp.ne.s32.totalorder %s48, %s64
      %p66 = scmp.eq.s32.totalorder %s26, 0
      %p67 = por %p65, %p66
      %s69 = sadd.s32 %s68, 1
      %p72 = scmp.eq.s32.totalorder %s20, 1
      %p73 = scmp.ne.s32.totalorder %s68, %s70
      %p74 = scmp.eq.s32.totalorder %s20, 0
      %p75 = por %p73, %p74
      %p76 = scmp.ne.s32.totalorder %s68, %s70
      %p77 = scmp.eq.s32.totalorder %s25, 1
      %p78 = por %p76, %p77
      %p79 = scmp.ne.s32.totalorder %s70, %s71
      %p80 = scmp.eq.s32.totalorder %s25, 0
      %p81 = por %p79, %p80
      %p82 = scmp.ne.s32.totalorder %s70, %s71
      %p83 = scmp.eq.s32.totalorder %s26, 1
      %p84 = por %p82, %p83
      %p86 = scmp.ne.s32.totalorder %s71, %s85
      %p87 = scmp.eq.s32.totalorder %s26, 0
      %p88 = por %p86, %p87
      %s90 = sadd.s32 %s89, 1
      %p93 = scmp.eq.s32.totalorder %s20, 1
      %p94 = scmp.ne.s32.totalorder %s89, %s91
      %p95 = scmp.eq.s32.totalorder %s20, 0
      %p96 = por %p94, %p95
      %p97 = scmp.ne.s32.totalorder %s89, %s91
      %p98 = scmp.eq.s32.totalorder %s25, 1
      %p99 = por %p97, %p98
      %p100 = scmp.ne.s32.totalorder %s91, %s92
      %p101 = scmp.eq.s32.totalorder %s25, 0
      %p102 = por %p100, %p101
      %p103 = scmp.ne.s32.totalorder %s91, %s92
      %p104 = scmp.eq.s32.totalorder %s26, 1
      %p105 = por %p103, %p104
      %p107 = scmp.ne.s32.totalorder %s92, %s106
      %p108 = scmp.eq.s32.totalorder %s26, 0
      %p109 = por %p107, %p108
      %s111 = sadd.s32 %s110, 1
      %p114 = scmp.eq.s32.totalorder %s20, 1
      %p115 = scmp.ne.s32.totalorder %s110, %s112
      %p116 = scmp.eq.s32.totalorder %s20, 0
      %p117 = por %p115, %p116
      %p118 = scmp.ne.s32.totalorder %s110, %s112
      %p119 = scmp.eq.s32.totalorder %s25, 1
      %p120 = por %p118, %p119
      %p121 = scmp.ne.s32.totalorder %s112, %s113
      %p122 = scmp.eq.s32.totalorder %s25, 0
      %p123 = por %p121, %p122
      %p124 = scmp.ne.s32.totalorder %s112, %s113
      %p125 = scmp.eq.s32.totalorder %s26, 1
      %p126 = por %p124, %p125
      %p128 = scmp.ne.s32.totalorder %s113, %s127
      %p129 = scmp.eq.s32.totalorder %s26, 0
      %p130 = por %p128, %p129
      %s132 = sadd.s32 %s131, 1
      %p135 = scmp.eq.s32.totalorder %s20, 1
      %p136 = scmp.ne.s32.totalorder %s131, %s133
      %p137 = scmp.eq.s32.totalorder %s20, 0
      %p138 = por %p136, %p137
      %p139 = scmp.ne.s32.totalorder %s131, %s133
      %p140 = scmp.eq.s32.totalorder %s25, 1
      %p141 = por %p139, %p140
      %p142 = scmp.ne.s32.totalorder %s133, %s134
      %p143 = scmp.eq.s32.totalorder %s25, 0
      %p144 = por %p142, %p143
      %p145 = scmp.ne.s32.totalorder %s133, %s134
      %p146 = scmp.eq.s32.totalorder %s26, 1
      %p147 = por %p145, %p146
      %p149 = scmp.ne.s32.totalorder %s134, %s148
      %p150 = scmp.eq.s32.totalorder %s26, 0
      %p151 = por %p149, %p150
      %s153 = sadd.s32 %s152, 1
      %p156 = scmp.eq.s32.totalorder %s20, 1
      %p157 = scmp.ne.s32.totalorder %s152, %s154
      %p158 = scmp.eq.s32.totalorder %s20, 0
      %p159 = por %p157, %p158
      %p160 = scmp.ne.s32.totalorder %s152, %s154
      %p161 = scmp.eq.s32.totalorder %s25, 1
      %p162 = por %p160, %p161
      %p163 = scmp.ne.s32.totalorder %s154, %s155
      %p164 = scmp.eq.s32.totalorder %s25, 0
      %p165 = por %p163, %p164
      %p166 = scmp.ne.s32.totalorder %s154, %s155
      %p167 = scmp.eq.s32.totalorder %s26, 1
      %p168 = por %p166, %p167
      %p170 = scmp.ne.s32.totalorder %s155, %s169
      %p171 = scmp.eq.s32.totalorder %s26, 0
      %p172 = por %p170, %p171
      %s174 = sadd.s32 %s173, 1
      %p177 = scmp.eq.s32.totalorder %s20, 1
      %p178 = scmp.ne.s32.totalorder %s173, %s175
      %p179 = scmp.eq.s32.totalorder %s20, 0
      %p180 = por %p178, %p179
      %p181 = scmp.ne.s32.totalorder %s173, %s175
      %p182 = scmp.eq.s32.totalorder %s25, 1
      %p183 = por %p181, %p182
      %p184 = scmp.ne.s32.totalorder %s175, %s176
      %p185 = scmp.eq.s32.totalorder %s25, 0
      %p186 = por %p184, %p185
      %p187 = scmp.ne.s32.totalorder %s175, %s176
      %p188 = scmp.eq.s32.totalorder %s26, 1
      %p189 = por %p187, %p188
      %p191 = scmp.ne.s32.totalorder %s176, %s190
      %p192 = scmp.eq.s32.totalorder %s26, 0
      %p193 = por %p191, %p192
      %s195 = sadd.s32 %s194, 1
      %p198 = scmp.eq.s32.totalorder %s20, 1
      %p199 = scmp.ne.s32.totalorder %s194, %s196
      %p200 = scmp.eq.s32.totalorder %s20, 0
      %p201 = por %p199, %p200
      %p202 = scmp.ne.s32.totalorder %s194, %s196
      %p203 = scmp.eq.s32.totalorder %s25, 1
      %p204 = por %p202, %p203
      %p205 = scmp.ne.s32.totalorder %s196, %s197
      %p206 = scmp.eq.s32.totalorder %s25, 0
      %p207 = por %p205, %p206
      %p208 = scmp.ne.s32.totalorder %s196, %s197
      %p209 = scmp.eq.s32.totalorder %s26, 1
      %p210 = por %p208, %p209
      %p212 = scmp.ne.s32.totalorder %s197, %s211
      %p213 = scmp.eq.s32.totalorder %s26, 0
      %p214 = por %p212, %p213
      %s216 = sadd.s32 %s215, 1
      %p219 = scmp.eq.s32.totalorder %s20, 1
      %p220 = scmp.ne.s32.totalorder %s215, %s217
      %p221 = scmp.eq.s32.totalorder %s20, 0
      %p222 = por %p220, %p221
      %p223 = scmp.ne.s32.totalorder %s215, %s217
      %p224 = scmp.eq.s32.totalorder %s25, 1
      %p225 = por %p223, %p224
      %p226 = scmp.ne.s32.totalorder %s217, %s218
      %p227 = scmp.eq.s32.totalorder %s25, 0
      %p228 = por %p226, %p227
      %p229 = scmp.ne.s32.totalorder %s217, %s218
      %p230 = scmp.eq.s32.totalorder %s26, 1
      %p231 = por %p229, %p230
      %p233 = scmp.ne.s32.totalorder %s218, %s232
      %p234 = scmp.eq.s32.totalorder %s26, 0
      %p235 = por %p233, %p234
      %s237 = sadd.s32 %s236, 1
      %p240 = scmp.eq.s32.totalorder %s20, 1
      %p241 = scmp.ne.s32.totalorder %s236, %s238
      %p242 = scmp.eq.s32.totalorder %s20, 0
      %p243 = por %p241, %p242
      %p244 = scmp.ne.s32.totalorder %s236, %s238
      %p245 = scmp.eq.s32.totalorder %s25, 1
      %p246 = por %p244, %p245
      %p247 = scmp.ne.s32.totalorder %s238, %s239
      %p248 = scmp.eq.s32.totalorder %s25, 0
      %p249 = por %p247, %p248
      %p250 = scmp.ne.s32.totalorder %s238, %s239
      %p251 = scmp.eq.s32.totalorder %s26, 1
      %p252 = por %p250, %p251
      %p254 = scmp.ne.s32.totalorder %s239, %s253
      %p255 = scmp.eq.s32.totalorder %s26, 0
      %p256 = por %p254, %p255
      %s258 = sadd.s32 %s257, 1
      %p261 = scmp.eq.s32.totalorder %s20, 1
      %p262 = scmp.ne.s32.totalorder %s257, %s259
      %p263 = scmp.eq.s32.totalorder %s20, 0
      %p264 = por %p262, %p263
      %p265 = scmp.ne.s32.totalorder %s257, %s259
      %p266 = scmp.eq.s32.totalorder %s25, 1
      %p267 = por %p265, %p266
      %p268 = scmp.ne.s32.totalorder %s259, %s260
      %p269 = scmp.eq.s32.totalorder %s25, 0
      %p270 = por %p268, %p269
      %p271 = scmp.ne.s32.totalorder %s259, %s260
      %p272 = scmp.eq.s32.totalorder %s26, 1
      %p273 = por %p271, %p272
      %p275 = scmp.ne.s32.totalorder %s260, %s274
      %p276 = scmp.eq.s32.totalorder %s26, 0
      %p277 = por %p275, %p276
      %s278 = ssub.s32 %s27, %s39
      %s279 = ssub.s32 %s28, %s35
      %s280 = sor.u32 %s278, %s279
      %p281 = scmp.eq.s32.totalorder %s280, 0
      %s283 = sadd.s32 %s282, 1
      %s284 = scalar_select %p281, %s282, %s283
      %p287 = pneg %p281
      %p288 = scmp.eq.s32.totalorder %s20, 1
      %p289 = por %p287, %p288
      %p290 = scmp.ne.s32.totalorder %s282, %s285
      %p291 = scmp.eq.s32.totalorder %s20, 0
      %p292 = por %p290, %p291
      %p293 = scmp.ne.s32.totalorder %s282, %s285
      %p294 = scmp.eq.s32.totalorder %s25, 1
      %p295 = por %p293, %p294
      %p296 = scmp.ne.s32.totalorder %s285, %s286
      %p297 = scmp.eq.s32.totalorder %s25, 0
      %p298 = por %p296, %p297
      %p299 = scmp.ne.s32.totalorder %s285, %s286
      %p300 = scmp.eq.s32.totalorder %s26, 1
      %p301 = por %p299, %p300
      %p303 = scmp.ne.s32.totalorder %s286, %s302
      %p304 = scmp.eq.s32.totalorder %s26, 0
      %p305 = por %p303, %p304
      %p306 = scmp.le.s32.totalorder 1, %s20
      %p307 = scmp.lt.s32.totalorder %s20, 3
      %p308 = pnand %p306, %p307
      %p309 = pneg %p308
      // Predicated region
      $region9: #{tpu_custom_call.1} parent=5 // pred_check
        _
      $region10: #{tpu_custom_call.1} parent=5 // pred_check_branch
        %311 = sbr.rel (%p308) target = $region12
      $region11: #{tpu_custom_call.1} parent=5 // pred_region
        %s312 = ssub.s32 %s20, 1
        // Predicated region
        $region13: #{tpu_custom_call.1} parent=11 // pred_check
          %p313 = pneg %p81
        $region14: #{tpu_custom_call.1} parent=11 // pred_check_branch
          %315 = sbr.rel (%p313) target = $region16
        $region15: #{tpu_custom_call.1} parent=11 // pred_region
          _
        $region16: #{tpu_custom_call.1} parent=11 // pred_fallthru
          _
        // Predicated region
        $region17: #{tpu_custom_call.1} parent=11 // pred_check
          %p316 = pneg %p102
        $region18: #{tpu_custom_call.1} parent=11 // pred_check_branch
          %318 = sbr.rel (%p316) target = $region20
        $region19: #{tpu_custom_call.1} parent=11 // pred_region
          _
        $region20: #{tpu_custom_call.1} parent=11 // pred_fallthru
          _
        // Predicated region
        $region21: #{tpu_custom_call.1} parent=11 // pred_check
          %p319 = pneg %p123
        $region22: #{tpu_custom_call.1} parent=11 // pred_check_branch
          %321 = sbr.rel (%p319) target = $region24
        $region23: #{tpu_custom_call.1} parent=11 // pred_region
          _
        $region24: #{tpu_custom_call.1} parent=11 // pred_fallthru
          _
        // Predicated region
        $region25: #{tpu_custom_call.1} parent=11 // pred_check
          %p322 = pneg %p144
        $region26: #{tpu_custom_call.1} parent=11 // pred_check_branch
          %324 = sbr.rel (%p322) target = $region28
        $region27: #{tpu_custom_call.1} parent=11 // pred_region
          _
        $region28: #{tpu_custom_call.1} parent=11 // pred_fallthru
          _
        // Predicated region
        $region29: #{tpu_custom_call.1} parent=11 // pred_check
          %p325 = pneg %p165
        $region30: #{tpu_custom_call.1} parent=11 // pred_check_branch
          %327 = sbr.rel (%p325) target = $region32
        $region31: #{tpu_custom_call.1} parent=11 // pred_region
          _
        $region32: #{tpu_custom_call.1} parent=11 // pred_fallthru
          _
        // Predicated region
        $region33: #{tpu_custom_call.1} parent=11 // pred_check
          %p328 = pneg %p186
        $region34: #{tpu_custom_call.1} parent=11 // pred_check_branch
          %330 = sbr.rel (%p328) target = $region36
        $region35: #{tpu_custom_call.1} parent=11 // pred_region
          _
        $region36: #{tpu_custom_call.1} parent=11 // pred_fallthru
          _
        // Predicated region
        $region37: #{tpu_custom_call.1} parent=11 // pred_check
          %p331 = pneg %p207
        $region38: #{tpu_custom_call.1} parent=11 // pred_check_branch
          %333 = sbr.rel (%p331) target = $region40
        $region39: #{tpu_custom_call.1} parent=11 // pred_region
          _
        $region40: #{tpu_custom_call.1} parent=11 // pred_fallthru
          _
        // Predicated region
        $region41: #{tpu_custom_call.1} parent=11 // pred_check
          %p334 = pneg %p228
        $region42: #{tpu_custom_call.1} parent=11 // pred_check_branch
          %336 = sbr.rel (%p334) target = $region44
        $region43: #{tpu_custom_call.1} parent=11 // pred_region
          _
        $region44: #{tpu_custom_call.1} parent=11 // pred_fallthru
          _
        // Predicated region
        $region45: #{tpu_custom_call.1} parent=11 // pred_check
          %p337 = pneg %p249
        $region46: #{tpu_custom_call.1} parent=11 // pred_check_branch
          %339 = sbr.rel (%p337) target = $region48
        $region47: #{tpu_custom_call.1} parent=11 // pred_region
          _
        $region48: #{tpu_custom_call.1} parent=11 // pred_fallthru
          _
        // Predicated region
        $region49: #{tpu_custom_call.1} parent=11 // pred_check
          %p340 = pneg %p270
        $region50: #{tpu_custom_call.1} parent=11 // pred_check_branch
          %342 = sbr.rel (%p340) target = $region52
        $region51: #{tpu_custom_call.1} parent=11 // pred_region
          _
        $region52: #{tpu_custom_call.1} parent=11 // pred_fallthru
          _
      $region12: #{tpu_custom_call.1} parent=5 // pred_fallthru
        _
      %p343 = scmp.lt.s32.totalorder %s20, 2
      // Predicated region
      $region53: #{tpu_custom_call.1} parent=5 // pred_check
        %p344 = pneg %p343
      $region54: #{tpu_custom_call.1} parent=5 // pred_check_branch
        %346 = sbr.rel (%p344) target = $region56
      $region55: #{tpu_custom_call.1} parent=5 // pred_region
        // Predicated region
        $region57: #{tpu_custom_call.1} parent=55 // pred_check
          %p347 = pneg %p54
        $region58: #{tpu_custom_call.1} parent=55 // pred_check_branch
          %349 = sbr.rel (%p347) target = $region60
        $region59: #{tpu_custom_call.1} parent=55 // pred_region
          %p350 = scmp.lt.s32.totalorder %s27, 1
          %s351 = scalar_select %p350, %s27, 1
          %p352 = scmp.lt.s32.totalorder %s28, 0
          %s353 = scalar_select %p352, %s28, 0
          %s354 = sadd.s32 %s353, %s351
          %s355 = smul.addr %s354, 4
          %s356 = scalar_lea.vmem %s0, %s355
        $region60: #{tpu_custom_call.1} parent=55 // pred_fallthru
          _
      $region56: #{tpu_custom_call.1} parent=5 // pred_fallthru
        _
      %p357 = scmp.le.s32.totalorder 1, %s20
      %p358 = scmp.lt.s32.totalorder %s20, 3
      %p359 = pnand %p357, %p358
      %p360 = pneg %p359
      // Predicated region
      $region61: #{tpu_custom_call.1} parent=5 // pred_check
        _
      $region62: #{tpu_custom_call.1} parent=5 // pred_check_branch
        %362 = sbr.rel (%p359) target = $region64
      $region63: #{tpu_custom_call.1} parent=5 // pred_region
        %s363 = ssub.s32 %s20, 1
        %p364 = scmp.lt.s32.totalorder %s29, 1
        %s365 = scalar_select %p364, %s29, 1
        %p366 = scmp.lt.s32.totalorder %s30, 0
        %s367 = scalar_select %p366, %s30, 0
        %s368 = sadd.s32 %s367, %s365
        %s369 = smul.addr %s368, 4
        %s370 = scalar_lea.vmem %s0, %s369
        %p371 = pneg %p60
        %p372 = pneg %p57
        %p373 = pneg %p81
        %p374 = pneg %p78
        %p375 = pneg %p102
        %p376 = pneg %p99
        %p377 = pneg %p123
        %p378 = pneg %p120
        %p379 = pneg %p144
        %p380 = pneg %p141
        %p381 = pneg %p165
        %p382 = pneg %p162
        %p383 = pneg %p186
        %p384 = pneg %p183
        %p385 = pneg %p207
        %p386 = pneg %p204
        %p387 = pneg %p228
        %p388 = pneg %p225
        %p389 = pneg %p249
        %p390 = pneg %p246
        %p391 = pneg %p270
        %p392 = pneg %p267
        %p393 = pneg %p298
        %p394 = pneg %p295
        %s395 = sand.u32 %s285, 1
        %s396 = scalar_lea.sflag [#allocation3], %s395
        %s397 = sand.u32 %s285, 1
        %s398 = smul.addr %s397, 8
        %s399 = scalar_lea.vmem [#allocation2], %s398
        %p400 = scmp.lt.s32.totalorder %s29, 1
        %s401 = scalar_select %p400, %s29, 1
        %p402 = scmp.lt.s32.totalorder %s30, 0
        %s403 = scalar_select %p402, %s30, 0
        %s404 = sadd.s32 %s403, %s401
        %s405 = smul.addr %s404, 4
        %s406 = scalar_lea.vmem %s0, %s405
        %v407 = vld [vmem:[%s1] sm:$0xff]
        %v408 = vld [vmem:[%s1 + $0x8] sm:$0xff]
        %v409 = vld [vmem:[%s1 + $0x10] sm:$0xff]
        %v410 = vld [vmem:[%s1 + $0x18] sm:$0xff]
        %v411 = vld [vmem:[%s2] sm:$0xff]
        %v412 = vld [vmem:[%s2 + $0x8] sm:$0xff]
        %v413 = vld [vmem:[%s2 + $0x10] sm:$0xff]
        %v414 = vld [vmem:[%s2 + $0x18] sm:$0xff]
        %v415 = vld [vmem:[%s3] sm:$0xff]
        %v416 = vld [vmem:[%s3 + $0x8] sm:$0xff]
        %v417 = vld [vmem:[%s3 + $0x10] sm:$0xff]
        %v418 = vld [vmem:[%s3 + $0x18] sm:$0xff]
        %v419 = vld [vmem:[%s4] sm:$0xff]
        %v420 = vld [vmem:[%s4 + $0x8] sm:$0xff]
        %v421 = vld [vmem:[%s4 + $0x10] sm:$0xff]
        %v422 = vld [vmem:[%s4 + $0x18] sm:$0xff]
        %v423 = vld [vmem:[%s5] sm:$0xff]
        %v424 = vld [vmem:[%s5 + $0x8] sm:$0xff]
        %v425 = vld [vmem:[%s5 + $0x10] sm:$0xff]
        %v426 = vld [vmem:[%s5 + $0x18] sm:$0xff]
        %v427 = vld [vmem:[%s6] sm:$0xff]
        %v428 = vld [vmem:[%s6 + $0x8] sm:$0xff]
        %v429 = vld [vmem:[%s6 + $0x10] sm:$0xff]
        %v430 = vld [vmem:[%s6 + $0x18] sm:$0xff]
        %v431 = vld [vmem:[%s7] sm:$0xff]
        %v432 = vld [vmem:[%s7 + $0x8] sm:$0xff]
        %v433 = vld [vmem:[%s7 + $0x10] sm:$0xff]
        %v434 = vld [vmem:[%s7 + $0x18] sm:$0xff]
        %v435 = vld [vmem:[%s8] sm:$0xff]
        %v436 = vld [vmem:[%s8 + $0x8] sm:$0xff]
        %v437 = vld [vmem:[%s8 + $0x10] sm:$0xff]
        %v438 = vld [vmem:[%s8 + $0x18] sm:$0xff]
        %v439 = vld [vmem:[%s9] sm:$0xff]
        %v440 = vld [vmem:[%s10] sm:$0xff]
        %v441 = vld [vmem:[%s406] sm:$0xf]
        %443 = vset.pattern.permute.xlu0 0
        %444 = vperm.xlu0 %443, %v411
        %v445 = vpop.permute.xlu0 %444
        %448 = vset.pattern.permute.xlu0 0
        %449 = vperm.xlu0 %448, %v412
        %v450 = vpop.permute.xlu0 %449
        %453 = vset.pattern.permute.xlu0 0
        %454 = vperm.xlu0 %453, %v413
        %v455 = vpop.permute.xlu0 %454
        %458 = vset.pattern.permute.xlu0 0
        %459 = vperm.xlu0 %458, %v414
        %v460 = vpop.permute.xlu0 %459
        %vm462 = vcmask 31744
        %v464 = vsel %vm462, %v407, 0
        %v467 = vsel %vm462, %v408, 0
        %v470 = vsel %vm462, %v409, 0
        %v473 = vsel %vm462, %v410, 0
        %vm475 = vcmask 1043456
        %v477 = vsel %vm475, %v441, 0
        %479 = vmatprep.subr.mxu0 0.0
        %480 = vmatpush1.msra.mxu0 %v477
        %481 = vmatprep.subr.mxu0 0.0
        %482 = vmatpush1.msra.mxu0 0.0
        %483 = vmatprep.subr.mxu0 0.0
        %484 = vmatpush1.msra.mxu0 0.0
        %485 = vmatprep.subr.mxu0 0.0
        %486 = vmatpush1.msra.mxu0 0.0
        %487 = vmatprep.subr.mxu0 0.0
        %488 = vmatpush1.msra.mxu0 0.0
        %489 = vmatprep.subr.mxu0 0.0
        %490 = vmatpush1.msra.mxu0 0.0
        %491 = vmatprep.subr.mxu0 0.0
        %492 = vmatpush1.msra.mxu0 0.0
        %493 = vmatprep.subr.mxu0 0.0
        %494 = vmatpush1.msra.mxu0 0.0
        %495 = vmatprep.subr.mxu0 0.0
        %496 = vmatpush1.msra.mxu0 0.0
        %497 = vmatprep.subr.mxu0 0.0
        %498 = vmatpush1.msra.mxu0 0.0
        %499 = vmatprep.subr.mxu0 0.0
        %500 = vmatpush1.msra.mxu0 0.0
        %501 = vmatprep.subr.mxu0 0.0
        %502 = vmatpush1.msra.mxu0 0.0
        %503 = vmatprep.subr.mxu0 0.0
        %504 = vmatpush1.msra.mxu0 0.0
        %505 = vmatprep.subr.mxu0 0.0
        %506 = vmatpush1.msra.mxu0 0.0
        %507 = vmatprep.subr.mxu0 0.0
        %508 = vmatpush1.msra.mxu0 0.0
        %509 = vmatprep.subr.mxu0 0.0
        %510 = vmatpush1.msra.mxu0 0.0
        %511 = vmatprep.subr.mxu0 0.0
        %512 = vmatpush1.msra.mxu0 0.0
        %513 = vmatprep.subr.mxu0 0.0
        %514 = vmatpush1.msra.mxu0 0.0
        %515 = vmatprep.subr.mxu0 0.0
        %516 = vmatpush1.msra.mxu0 0.0
        %517 = vmatprep.subr.mxu0 0.0
        %518 = vmatpush1.msra.mxu0 0.0
        %519 = vmatprep.subr.mxu0 0.0
        %520 = vmatpush1.msra.mxu0 0.0
        %521 = vmatprep.subr.mxu0 0.0
        %522 = vmatpush1.msra.mxu0 0.0
        %523 = vmatprep.subr.mxu0 0.0
        %524 = vmatpush1.msra.mxu0 0.0
        %525 = vmatprep.subr.mxu0 0.0
        %526 = vmatpush1.msra.mxu0 0.0
        %527 = vmatprep.subr.mxu0 0.0
        %528 = vmatpush1.msra.mxu0 0.0
        %529 = vmatprep.subr.mxu0 0.0
        %530 = vmatpush1.msra.mxu0 0.0
        %531 = vmatprep.subr.mxu0 0.0
        %532 = vmatpush1.msra.mxu0 0.0
        %533 = vmatprep.subr.mxu0 0.0
        %534 = vmatpush1.msra.mxu0 0.0
        %535 = vmatprep.subr.mxu0 0.0
        %536 = vmatpush1.msra.mxu0 0.0
        %537 = vmatprep.subr.mxu0 0.0
        %538 = vmatpush1.msra.mxu0 0.0
        %539 = vmatprep.subr.mxu0 0.0
        %540 = vmatpush1.msra.mxu0 0.0
        %541 = vmatprep.subr.mxu0 0.0
        %542 = vmatpush1.msra.mxu0 0.0
        %543 = vmatprep.mubr.f32.mxu0 0.0
        %544 = vmatmul.mubr.f32.gmra.mrb[0].mxu0 %v464
        %v545 = vpop.f32.mrb[0].mxu0
        %v546 = vadd.f32 %v445, %v545
        %v547 = vpop.f32.mrb[0].mxu0
        %548 = vmatprep.mubr.f32.mxu0 0.0
        %549 = vmatmul.mubr.f32.gmra.mrb[0].mxu0 %v467
        %v550 = vpop.f32.mrb[0].mxu0
        %v551 = vadd.f32 %v450, %v550
        %v552 = vpop.f32.mrb[0].mxu0
        %553 = vmatprep.mubr.f32.mxu0 0.0
        %554 = vmatmul.mubr.f32.gmra.mrb[0].mxu0 %v470
        %v555 = vpop.f32.mrb[0].mxu0
        %v556 = vadd.f32 %v455, %v555
        %v557 = vpop.f32.mrb[0].mxu0
        %558 = vmatprep.mubr.f32.mxu0 0.0
        %559 = vmatmul.mubr.f32.gmra.mrb[0].mxu0 %v473
        %v560 = vpop.f32.mrb[0].mxu0
        %v561 = vadd.f32 %v460, %v560
        %v562 = vpop.f32.mrb[0].mxu0
        %563 = vdwg.mxu0
        %vm564 = vcmask 130048
        %v565 = vsel %vm564, %v546, 0.0
        %v566 = vsel %vm564, %v551, 0.0
        %v567 = vadd.f32 %v565, %v566
        %v568 = vsel %vm564, %v556, 0.0
        %v569 = vadd.f32 %v567, %v568
        %v570 = vsel %vm564, %v561, 0.0
        %v571 = vadd.f32 %v569, %v570
        %v572 = vrot.slane %v571, 4
        %v573 = vadd.f32 %v571, %v572
        %v574 = vrot.slane %v573, 2
        %v575 = vadd.f32 %v573, %v574
        %v576 = vrot.slane %v575, 1
        %v577 = vadd.f32 %v575, %v576
        %v578 = vrcp.pop 32.0
        %v579 = vmul.f32 %v577, %v578
        %v580 = vsub.f32 %v546, %v579
        %v581 = vsub.f32 %v551, %v579
        %v582 = vsub.f32 %v556, %v579
        %v583 = vsub.f32 %v561, %v579
        %v584 = vmul.f32 %v580, %v580
        %v585 = vmul.f32 %v581, %v581
        %v586 = vmul.f32 %v582, %v582
        %v587 = vmul.f32 %v583, %v583
        %v588 = vsel %vm564, %v584, 0.0
        %v589 = vsel %vm564, %v585, 0.0
        %v590 = vadd.f32 %v588, %v589
        %v591 = vsel %vm564, %v586, 0.0
        %v592 = vadd.f32 %v590, %v591
        %v593 = vsel %vm564, %v587, 0.0
        %v594 = vadd.f32 %v592, %v593
        %v595 = vrot.slane %v594, 4
        %v596 = vadd.f32 %v594, %v595
        %v597 = vrot.slane %v596, 2
        %v598 = vadd.f32 %v596, %v597
        %v599 = vrot.slane %v598, 1
        %v600 = vadd.f32 %v598, %v599
        %v601 = vmul.f32 %v600, %v578
        %v602 = vadd.f32 %v601, 1e-05
        %v603 = vrsqrt.pop %v602
        %v604 = vmul.f32 %v580, %v603
        %v605 = vmul.f32 %v581, %v603
        %v606 = vmul.f32 %v582, %v603
        %v607 = vmul.f32 %v583, %v603
        %609 = vset.pattern.permute.xlu0 0
        %610 = vperm.xlu0 %609, %v415
        %v611 = vpop.permute.xlu0 %610
        %614 = vset.pattern.permute.xlu0 0
        %615 = vperm.xlu0 %614, %v416
        %v616 = vpop.permute.xlu0 %615
        %619 = vset.pattern.permute.xlu0 0
        %620 = vperm.xlu0 %619, %v417
        %v621 = vpop.permute.xlu0 %620
        %624 = vset.pattern.permute.xlu0 0
        %625 = vperm.xlu0 %624, %v418
        %v626 = vpop.permute.xlu0 %625
        %v628 = vmul.f32 %v604, %v611
        %v629 = vmul.f32 %v605, %v616
        %v630 = vmul.f32 %v606, %v621
        %v631 = vmul.f32 %v607, %v626
        %633 = vset.pattern.permute.xlu0 0
        %634 = vperm.xlu0 %633, %v419
        %v635 = vpop.permute.xlu0 %634
        %638 = vset.pattern.permute.xlu0 0
        %639 = vperm.xlu0 %638, %v420
        %v640 = vpop.permute.xlu0 %639
        %643 = vset.pattern.permute.xlu0 0
        %644 = vperm.xlu0 %643, %v421
        %v645 = vpop.permute.xlu0 %644
        %648 = vset.pattern.permute.xlu0 0
        %649 = vperm.xlu0 %648, %v422
        %v650 = vpop.permute.xlu0 %649
        %v652 = vadd.f32 %v628, %v635
        %v653 = vadd.f32 %v629, %v640
        %v654 = vadd.f32 %v630, %v645
        %v655 = vadd.f32 %v631, %v650
        %vm656 = vcmp.ge.f32.partialorder %v652, 0.0
        %vm657 = vcmp.ge.f32.partialorder %v653, 0.0
        %vm658 = vcmp.ge.f32.partialorder %v654, 0.0
        %vm659 = vcmp.ge.f32.partialorder %v655, 0.0
        %v660 = vmul.f32 %v652, 0.01
        %v661 = vmul.f32 %v653, 0.01
        %v662 = vmul.f32 %v654, 0.01
        %v663 = vmul.f32 %v655, 0.01
        %v664 = vsel %vm656, %v652, %v660
        %v665 = vsel %vm657, %v653, %v661
        %v666 = vsel %vm658, %v654, %v662
        %v667 = vsel %vm659, %v655, %v663
        %669 = vset.pattern.permute.xlu0 0
        %670 = vperm.xlu0 %669, %v427
        %v671 = vpop.permute.xlu0 %670
        %674 = vset.pattern.permute.xlu0 0
        %675 = vperm.xlu0 %674, %v428
        %v676 = vpop.permute.xlu0 %675
        %679 = vset.pattern.permute.xlu0 0
        %680 = vperm.xlu0 %679, %v429
        %v681 = vpop.permute.xlu0 %680
        %684 = vset.pattern.permute.xlu0 0
        %685 = vperm.xlu0 %684, %v430
        %v686 = vpop.permute.xlu0 %685
        %vm688 = vcmask 261120
        %v690 = vsel %vm688, %v423, 0
        %v693 = vsel %vm688, %v424, 0
        %v696 = vsel %vm688, %v425, 0
        %v699 = vsel %vm688, %v426, 0
        %701 = vmatprep.subr.mxu0 0.0
        %702 = vmatpush1.msra.mxu0 %v664
        %703 = vmatprep.subr.mxu0 0.0
        %704 = vmatpush1.msra.mxu0 %v665
        %705 = vmatprep.subr.mxu0 0.0
        %706 = vmatpush1.msra.mxu0 %v666
        %707 = vmatprep.subr.mxu0 0.0
        %708 = vmatpush1.msra.mxu0 %v667
        %709 = vmatprep.subr.mxu0 0.0
        %710 = vmatpush1.msra.mxu0 0.0
        %711 = vmatprep.subr.mxu0 0.0
        %712 = vmatpush1.msra.mxu0 0.0
        %713 = vmatprep.subr.mxu0 0.0
        %714 = vmatpush1.msra.mxu0 0.0
        %715 = vmatprep.subr.mxu0 0.0
        %716 = vmatpush1.msra.mxu0 0.0
        %717 = vmatprep.subr.mxu0 0.0
        %718 = vmatpush1.msra.mxu0 0.0
        %719 = vmatprep.subr.mxu0 0.0
        %720 = vmatpush1.msra.mxu0 0.0
        %721 = vmatprep.subr.mxu0 0.0
        %722 = vmatpush1.msra.mxu0 0.0
        %723 = vmatprep.subr.mxu0 0.0
        %724 = vmatpush1.msra.mxu0 0.0
        %725 = vmatprep.subr.mxu0 0.0
        %726 = vmatpush1.msra.mxu0 0.0
        %727 = vmatprep.subr.mxu0 0.0
        %728 = vmatpush1.msra.mxu0 0.0
        %729 = vmatprep.subr.mxu0 0.0
        %730 = vmatpush1.msra.mxu0 0.0
        %731 = vmatprep.subr.mxu0 0.0
        %732 = vmatpush1.msra.mxu0 0.0
        %733 = vmatprep.subr.mxu0 0.0
        %734 = vmatpush1.msra.mxu0 0.0
        %735 = vmatprep.subr.mxu0 0.0
        %736 = vmatpush1.msra.mxu0 0.0
        %737 = vmatprep.subr.mxu0 0.0
        %738 = vmatpush1.msra.mxu0 0.0
        %739 = vmatprep.subr.mxu0 0.0
        %740 = vmatpush1.msra.mxu0 0.0
        %741 = vmatprep.subr.mxu0 0.0
        %742 = vmatpush1.msra.mxu0 0.0
        %743 = vmatprep.subr.mxu0 0.0
        %744 = vmatpush1.msra.mxu0 0.0
        %745 = vmatprep.subr.mxu0 0.0
        %746 = vmatpush1.msra.mxu0 0.0
        %747 = vmatprep.subr.mxu0 0.0
        %748 = vmatpush1.msra.mxu0 0.0
        %749 = vmatprep.subr.mxu0 0.0
        %750 = vmatpush1.msra.mxu0 0.0
        %751 = vmatprep.subr.mxu0 0.0
        %752 = vmatpush1.msra.mxu0 0.0
        %753 = vmatprep.subr.mxu0 0.0
        %754 = vmatpush1.msra.mxu0 0.0
        %755 = vmatprep.subr.mxu0 0.0
        %756 = vmatpush1.msra.mxu0 0.0
        %757 = vmatprep.subr.mxu0 0.0
        %758 = vmatpush1.msra.mxu0 0.0
        %759 = vmatprep.subr.mxu0 0.0
        %760 = vmatpush1.msra.mxu0 0.0
        %761 = vmatprep.subr.mxu0 0.0
        %762 = vmatpush1.msra.mxu0 0.0
        %763 = vmatprep.subr.mxu0 0.0
        %764 = vmatpush1.msra.mxu0 0.0
        %765 = vmatprep.mubr.f32.mxu0 0.0
        %766 = vmatmul.mubr.f32.gmra.mrb[0].mxu0 %v690
        %v767 = vpop.f32.mrb[0].mxu0
        %v768 = vadd.f32 %v671, %v767
        %v769 = vpop.f32.mrb[0].mxu0
        %770 = vmatprep.mubr.f32.mxu0 0.0
        %771 = vmatmul.mubr.f32.gmra.mrb[0].mxu0 %v693
        %v772 = vpop.f32.mrb[0].mxu0
        %v773 = vadd.f32 %v676, %v772
        %v774 = vpop.f32.mrb[0].mxu0
        %775 = vmatprep.mubr.f32.mxu0 0.0
        %776 = vmatmul.mubr.f32.gmra.mrb[0].mxu0 %v696
        %v777 = vpop.f32.mrb[0].mxu0
        %v778 = vadd.f32 %v681, %v777
        %v779 = vpop.f32.mrb[0].mxu0
        %780 = vmatprep.mubr.f32.mxu0 0.0
        %781 = vmatmul.mubr.f32.gmra.mrb[0].mxu0 %v699
        %v782 = vpop.f32.mrb[0].mxu0
        %v783 = vadd.f32 %v686, %v782
        %v784 = vpop.f32.mrb[0].mxu0
        %785 = vdwg.mxu0
        %v786 = vsel %vm564, %v768, 0.0
        %v787 = vsel %vm564, %v773, 0.0
        %v788 = vadd.f32 %v786, %v787
        %v789 = vsel %vm564, %v778, 0.0
        %v790 = vadd.f32 %v788, %v789
        %v791 = vsel %vm564, %v783, 0.0
        %v792 = vadd.f32 %v790, %v791
        %v793 = vrot.slane %v792, 4
        %v794 = vadd.f32 %v792, %v793
        %v795 = vrot.slane %v794, 2
        %v796 = vadd.f32 %v794, %v795
        %v797 = vrot.slane %v796, 1
        %v798 = vadd.f32 %v796, %v797
        %v799 = vmul.f32 %v798, %v578
        %v800 = vsub.f32 %v768, %v799
        %v801 = vsub.f32 %v773, %v799
        %v802 = vsub.f32 %v778, %v799
        %v803 = vsub.f32 %v783, %v799
        %v804 = vmul.f32 %v800, %v800
        %v805 = vmul.f32 %v801, %v801
        %v806 = vmul.f32 %v802, %v802
        %v807 = vmul.f32 %v803, %v803
        %v808 = vsel %vm564, %v804, 0.0
        %v809 = vsel %vm564, %v805, 0.0
        %v810 = vadd.f32 %v808, %v809
        %v811 = vsel %vm564, %v806, 0.0
        %v812 = vadd.f32 %v810, %v811
        %v813 = vsel %vm564, %v807, 0.0
        %v814 = vadd.f32 %v812, %v813
        %v815 = vrot.slane %v814, 4
        %v816 = vadd.f32 %v814, %v815
        %v817 = vrot.slane %v816, 2
        %v818 = vadd.f32 %v816, %v817
        %v819 = vrot.slane %v818, 1
        %v820 = vadd.f32 %v818, %v819
        %v821 = vmul.f32 %v820, %v578
        %v822 = vadd.f32 %v821, 1e-05
        %v823 = vrsqrt.pop %v822
        %v824 = vmul.f32 %v800, %v823
        %v825 = vmul.f32 %v801, %v823
        %v826 = vmul.f32 %v802, %v823
        %v827 = vmul.f32 %v803, %v823
        %829 = vset.pattern.permute.xlu0 0
        %830 = vperm.xlu0 %829, %v431
        %v831 = vpop.permute.xlu0 %830
        %834 = vset.pattern.permute.xlu0 0
        %835 = vperm.xlu0 %834, %v432
        %v836 = vpop.permute.xlu0 %835
        %839 = vset.pattern.permute.xlu0 0
        %840 = vperm.xlu0 %839, %v433
        %v841 = vpop.permute.xlu0 %840
        %844 = vset.pattern.permute.xlu0 0
        %845 = vperm.xlu0 %844, %v434
        %v846 = vpop.permute.xlu0 %845
        %v848 = vmul.f32 %v824, %v831
        %v849 = vmul.f32 %v825, %v836
        %v850 = vmul.f32 %v826, %v841
        %v851 = vmul.f32 %v827, %v846
        %853 = vset.pattern.permute.xlu0 0
        %854 = vperm.xlu0 %853, %v435
        %v855 = vpop.permute.xlu0 %854
        %858 = vset.pattern.permute.xlu0 0
        %859 = vperm.xlu0 %858, %v436
        %v860 = vpop.permute.xlu0 %859
        %863 = vset.pattern.permute.xlu0 0
        %864 = vperm.xlu0 %863, %v437
        %v865 = vpop.permute.xlu0 %864
        %868 = vset.pattern.permute.xlu0 0
        %869 = vperm.xlu0 %868, %v438
        %v870 = vpop.permute.xlu0 %869
        %v872 = vadd.f32 %v848, %v855
        %v873 = vadd.f32 %v849, %v860
        %v874 = vadd.f32 %v850, %v865
        %v875 = vadd.f32 %v851, %v870
        %vm876 = vcmp.ge.f32.partialorder %v872, 0.0
        %vm877 = vcmp.ge.f32.partialorder %v873, 0.0
        %vm878 = vcmp.ge.f32.partialorder %v874, 0.0
        %vm879 = vcmp.ge.f32.partialorder %v875, 0.0
        %v880 = vmul.f32 %v872, 0.01
        %v881 = vmul.f32 %v873, 0.01
        %v882 = vmul.f32 %v874, 0.01
        %v883 = vmul.f32 %v875, 0.01
        %v884 = vsel %vm876, %v872, %v880
        %v885 = vsel %vm877, %v873, %v881
        %v886 = vsel %vm878, %v874, %v882
        %v887 = vsel %vm879, %v875, %v883
        %889 = vset.pattern.permute.xlu0 0
        %890 = vperm.xlu0 %889, %v440
        %v891 = vpop.permute.xlu0 %890
        %v894 = vsel %vm688, %v439, 0
        %896 = vmatprep.subr.mxu0 0.0
        %897 = vmatpush1.msra.mxu0 %v884
        %898 = vmatprep.subr.mxu0 0.0
        %899 = vmatpush1.msra.mxu0 %v885
        %900 = vmatprep.subr.mxu0 0.0
        %901 = vmatpush1.msra.mxu0 %v886
        %902 = vmatprep.subr.mxu0 0.0
        %903 = vmatpush1.msra.mxu0 %v887
        %904 = vmatprep.subr.mxu0 0.0
        %905 = vmatpush1.msra.mxu0 0.0
        %906 = vmatprep.subr.mxu0 0.0
        %907 = vmatpush1.msra.mxu0 0.0
        %908 = vmatprep.subr.mxu0 0.0
        %909 = vmatpush1.msra.mxu0 0.0
        %910 = vmatprep.subr.mxu0 0.0
        %911 = vmatpush1.msra.mxu0 0.0
        %912 = vmatprep.subr.mxu0 0.0
        %913 = vmatpush1.msra.mxu0 0.0
        %914 = vmatprep.subr.mxu0 0.0
        %915 = vmatpush1.msra.mxu0 0.0
        %916 = vmatprep.subr.mxu0 0.0
        %917 = vmatpush1.msra.mxu0 0.0
        %918 = vmatprep.subr.mxu0 0.0
        %919 = vmatpush1.msra.mxu0 0.0
        %920 = vmatprep.subr.mxu0 0.0
        %921 = vmatpush1.msra.mxu0 0.0
        %922 = vmatprep.subr.mxu0 0.0
        %923 = vmatpush1.msra.mxu0 0.0
        %924 = vmatprep.subr.mxu0 0.0
        %925 = vmatpush1.msra.mxu0 0.0
        %926 = vmatprep.subr.mxu0 0.0
        %927 = vmatpush1.msra.mxu0 0.0
        %928 = vmatprep.subr.mxu0 0.0
        %929 = vmatpush1.msra.mxu0 0.0
        %930 = vmatprep.subr.mxu0 0.0
        %931 = vmatpush1.msra.mxu0 0.0
        %932 = vmatprep.subr.mxu0 0.0
        %933 = vmatpush1.msra.mxu0 0.0
        %934 = vmatprep.subr.mxu0 0.0
        %935 = vmatpush1.msra.mxu0 0.0
        %936 = vmatprep.subr.mxu0 0.0
        %937 = vmatpush1.msra.mxu0 0.0
        %938 = vmatprep.subr.mxu0 0.0
        %939 = vmatpush1.msra.mxu0 0.0
        %940 = vmatprep.subr.mxu0 0.0
        %941 = vmatpush1.msra.mxu0 0.0
        %942 = vmatprep.subr.mxu0 0.0
        %943 = vmatpush1.msra.mxu0 0.0
        %944 = vmatprep.subr.mxu0 0.0
        %945 = vmatpush1.msra.mxu0 0.0
        %946 = vmatprep.subr.mxu0 0.0
        %947 = vmatpush1.msra.mxu0 0.0
        %948 = vmatprep.subr.mxu0 0.0
        %949 = vmatpush1.msra.mxu0 0.0
        %950 = vmatprep.subr.mxu0 0.0
        %951 = vmatpush1.msra.mxu0 0.0
        %952 = vmatprep.subr.mxu0 0.0
        %953 = vmatpush1.msra.mxu0 0.0
        %954 = vmatprep.subr.mxu0 0.0
        %955 = vmatpush1.msra.mxu0 0.0
        %956 = vmatprep.subr.mxu0 0.0
        %957 = vmatpush1.msra.mxu0 0.0
        %958 = vmatprep.subr.mxu0 0.0
        %959 = vmatpush1.msra.mxu0 0.0
        %960 = vmatprep.mubr.f32.mxu0 0.0
        %961 = vmatmul.mubr.f32.gmra.mrb[0].mxu0 %v894
        %v962 = vpop.f32.mrb[0].mxu0
        %v963 = vadd.f32 %v891, %v962
        %v964 = vpop.f32.mrb[0].mxu0
        %965 = vdwg.mxu0
        %966 = vst.msk [vmem:[%s399] sm:$0xff] %vm564, %v963
        %s967 = sand.u32 %s285, 1
        %s968 = scalar_lea.sflag [#allocation3], %s967
        %s969 = sand.u32 %s285, 1
        %s970 = smul.addr %s969, 8
        %s971 = scalar_lea.vmem [#allocation2], %s970
        // Predicated region
        $region65: #{tpu_custom_call.1} parent=63 // pred_check
          %p972 = pneg %p295
        $region66: #{tpu_custom_call.1} parent=63 // pred_check_branch
          %974 = sbr.rel (%p972) target = $region68
        $region67: #{tpu_custom_call.1} parent=63 // pred_region
          %s976 = ssub.s32 128, 128
          %977 = vsyncadd %s968, %s976
          %s978 = sadd.s32 %s30, %s29
          %s979 = smul.addr %s978, 128
          %s980 = scalar_lea.hbm %s11, %s979
          %s982 = sshll.u32 %s971, 4
          %s983 = int_to_ptr.vmem [resolvable:$true] %s982
          %985 = dma.vmem_to_hbm [thread:$0]  %s983, 128, %s980, %s968
        $region68: #{tpu_custom_call.1} parent=63 // pred_fallthru
          _
      $region64: #{tpu_custom_call.1} parent=5 // pred_fallthru
        _
      %p986 = scmp.le.s32.totalorder 2, %s20
      // Predicated region
      $region69: #{tpu_custom_call.1} parent=5 // pred_check
        %p987 = pneg %p986
      $region70: #{tpu_custom_call.1} parent=5 // pred_check_branch
        %989 = sbr.rel (%p987) target = $region72
      $region71: #{tpu_custom_call.1} parent=5 // pred_region
        %s990 = ssub.s32 %s20, 2
        // Predicated region
        $region73: #{tpu_custom_call.1} parent=71 // pred_check
          %p991 = pneg %p301
        $region74: #{tpu_custom_call.1} parent=71 // pred_check_branch
          %993 = sbr.rel (%p991) target = $region76
        $region75: #{tpu_custom_call.1} parent=71 // pred_region
          %s994 = sand.u32 %s286, 1
          %s995 = scalar_lea.sflag [#allocation3], %s994
          %s996 = sand.u32 %s286, 1
          %s997 = smul.addr %s996, 8
          %s998 = scalar_lea.vmem [#allocation2], %s997
          %999 = dma.done %s995, 128
        $region76: #{tpu_custom_call.1} parent=71 // pred_fallthru
          _
      $region72: #{tpu_custom_call.1} parent=5 // pred_fallthru
        _
    $region6: #{tpu_custom_call.1} parent=1 // loop_footer
      %s24 = sadd.s32 1, %s20
    $region7: #{tpu_custom_call.1} parent=1 // loop_footer_branch
      %19 = sbr.rel target = $region3
    $region8: #{tpu_custom_call.1} parent=1 // loop_exit
      _
    %1000 = vsyncpa [#allocation3], 1
    %s1001 = scalar_lea.sflag [#allocation3], 1
    %1002 = vsyncpa %s1001, 1

</llo_original>
